<compile_context>
chip_gen: v7x
topology: tpu7x:2x2x1
jax: 0.10.0
libtpu: 0.0.40
codegen_flags: <defaults>
</compile_context>

<pallas_src>
import functools

import jax
import jax.numpy as jnp
from jax.experimental import pallas as pl
from jax.experimental.pallas import tpu as pltpu


def _round_up(x, m):
    return ((x + m - 1) // m) * m


def _vmem_capacity_bytes():
    try:
        return int(pltpu.get_tpu_info().vmem_capacity_bytes)
    except Exception:
        return 64 << 20  # conservative default (v7x per-TC VMEM)


_VMEM_CAP = _vmem_capacity_bytes()
_VMEM_LIMIT = int(0.70 * _VMEM_CAP)      # compiler scoped-VMEM limit
_FUSED_BUDGET = int(0.50 * _VMEM_CAP)    # working-set budget for fused groups
_BIG_VMEM = _VMEM_CAP >= (96 << 20)      # v5e/v6e (128 MiB) vs v7x (64 MiB)


# ---------------------------------------------------------------------------
# Parameter construction / one-time preparation
# ---------------------------------------------------------------------------
def init_mlp_params(key, in_size, layer_sizes, dtype=jnp.float32):
    """he_normal (kaiming normal, fan_in) weights, zero biases — matches
    kernel_initializer='he_normal', bias_initializer='zeros'."""
    params = []
    for size in layer_sizes:
        key, wk = jax.random.split(key)
        std = jnp.sqrt(2.0 / in_size)
        # PyTorch Linear weight is [out, in]; we store the transpose [in, out].
        w = (jax.random.normal(wk, (in_size, size), dtype=jnp.float32) * std).astype(dtype)
        b = jnp.zeros((size,), dtype=dtype)
        params.append((w, b))
        in_size = size
    return params


def prepare_params(params, *, param_dtype=jnp.bfloat16):
    """One-time prep (do NOT call per forward step):
      * cast weights to param_dtype (bf16 by default — MXU native, halves DMA),
      * zero-pad both feature dims of every layer up to multiples of 128 so all
        kernels see lane-dense, pad-free operands (padded columns stay exactly
        zero through bias-add + ReLU, so chaining layers through the padded
        widths is numerically identical).
    Biases stay f32 (tiny; exact epilogue add)."""
    in_size = params[0][0].shape[0]
    out_size = params[-1][0].shape[1]
    layers = []
    for w, b in params:
        k, n = w.shape
        kp, np_ = _round_up(k, 128), _round_up(n, 128)
        wp = jnp.zeros((kp, np_), dtype=param_dtype).at[:k, :n].set(
            w.astype(param_dtype))
        bp = jnp.zeros((1, np_), dtype=jnp.float32).at[:, :n].set(
            b.astype(jnp.float32))
        layers.append((wp, bp))
    return {
        "layers": layers,
        "in_size": in_size,
        "padded_in": _round_up(in_size, 128),
        "out_size": out_size,
    }


# ---------------------------------------------------------------------------
# Fused whole-MLP (or layer-group) kernel: weights resident in VMEM,
# grid only over batch tiles.
# ---------------------------------------------------------------------------
def _fused_mlp_kernel(*refs, n_layers, compute_dtype):
    # refs = (x_ref, w1_ref, b1_ref, ..., wL_ref, bL_ref, out_ref)
    x_ref = refs[0]
    out_ref = refs[-1]

    h = x_ref[...].astype(jnp.float32)
    for l in range(n_layers):
        w_ref = refs[1 + 2 * l]
        b_ref = refs[2 + 2 * l]
        h = jnp.dot(
            h.astype(compute_dtype),
            w_ref[...].astype(compute_dtype),   # no-op cast: weights pre-cast
            preferred_element_type=jnp.float32,
        )
        h = jnp.maximum(h + b_ref[...], 0.0)    # ReLU after every Linear
    out_ref[...] = h.astype(out_ref.dtype)


def mlp_fused_pallas(x, layers, *, compute_dtype, tm, vmem_limit_bytes=None):
    """Run a (group of) layer(s) fused in a single pallas_call.

    x:      [M, K0]            (K0 == layers[0] weight's padded in-dim)
    layers: list of (w [Kp, Np] pre-padded, b [1, Np] f32)
    Returns [M, Np_last] (padded feature width kept for chaining)."""
    M, K0 = x.shape
    n_layers = len(layers)
    n_last = layers[-1][0].shape[1]
    mp = _round_up(M, tm)
    xp = jnp.pad(x, ((0, mp - M), (0, 0))) if mp != M else x

    kernel = functools.partial(
        _fused_mlp_kernel, n_layers=n_layers, compute_dtype=compute_dtype)

    def _call(single_buffer_weights):
        in_specs = [pl.BlockSpec((tm, K0), lambda i: (i, 0))]
        args = [xp]
        for w, b in layers:
            kl, nl = w.shape
            if single_buffer_weights:
                # Constant index_map -> no point double-buffering the resident
                # weights; halves their VMEM footprint (matters most on v7x).
                w_spec = pl.BlockSpec((kl, nl), lambda i: (0, 0),
                                      pipeline_mode=pl.Buffered(1))
                b_spec = pl.BlockSpec((1, nl), lambda i: (0, 0),
                                      pipeline_mode=pl.Buffered(1))
            else:
                w_spec = pl.BlockSpec((kl, nl), lambda i: (0, 0))
                b_spec = pl.BlockSpec((1, nl), lambda i: (0, 0))
            in_specs += [w_spec, b_spec]
            args += [w, b]
        return pl.pallas_call(
            kernel,
            out_shape=jax.ShapeDtypeStruct((mp, n_last), x.dtype),
            grid_spec=pltpu.PrefetchScalarGridSpec(
                num_scalar_prefetch=0,
                grid=(mp // tm,),
                in_specs=in_specs,
                out_specs=pl.BlockSpec((tm, n_last), lambda i: (i, 0)),
            ),
            compiler_params=pltpu.CompilerParams(
                dimension_semantics=("parallel",),
                vmem_limit_bytes=vmem_limit_bytes or _VMEM_LIMIT,
            ),
        )(*args)

    try:
        out = _call(True)
    except Exception:
        out = _call(False)   # safety net if Buffered(1) is rejected
    return out[:M] if mp != M else out


def _pick_batch_tile(M, widest_features):
    """Batch tile: whole batch for small M; MXU-aligned (256) tiles giving >=2
    grid steps for large M (dual-TC v7x); capped so the carried f32
    intermediate stays well under VMEM pressure."""
    m8 = _round_up(M, 8)
    if m8 <= 256:
        tm = m8
    elif m8 <= 1024:
        tm = 256
    else:
        tm = 512
    while tm > 128 and tm * widest_features * 4 > (4 << 20):
        tm = _round_up(tm // 2, 8)
    return max(tm, 8)


def _fused_group_bytes(k0, layers, tm, x_itemsize):
    """VMEM working-set estimate for a fused layer group."""
    total = 2 * tm * k0 * x_itemsize                    # x tile, double-buffered
    widest = k0
    n_last = k0
    for w, b in layers:
        kl, nl = w.shape
        total += kl * nl * w.dtype.itemsize + nl * 4    # single-buffered weights
        widest = max(widest, nl)
        n_last = nl
    total += 2 * tm * n_last * x_itemsize               # out tile, double-buffered
    total += 2 * tm * widest * 4                        # f32 carried h + headroom
    return total


# ---------------------------------------------------------------------------
# Per-layer fallback: fused Linear(+bias)+ReLU, tiled matmul with K-reduction
# ---------------------------------------------------------------------------
def _linear_relu_kernel(x_ref, w_ref, b_ref, o_ref, acc_ref, *, compute_dtype):
    k = pl.program_id(2)

    @pl.when(k == 0)
    def _():
        acc_ref[...] = jnp.zeros_like(acc_ref)

    acc_ref[...] += jnp.dot(
        x_ref[...].astype(compute_dtype),
        w_ref[...].astype(compute_dtype),
        preferred_element_type=jnp.float32,
    )

    @pl.when(k == pl.num_programs(2) - 1)
    def _():
        out = acc_ref[...] + b_ref[...].astype(jnp.float32)  # f32 epilogue
        out = jnp.maximum(out, 0.0)
        o_ref[...] = out.astype(o_ref.dtype)


def _pick_divisor_tile(dim, max_tile):
    """Largest multiple-of-128 tile <= max_tile that divides dim (dim % 128 == 0)."""
    best = 128
    t = 128
    while t <= min(dim, max_tile):
        if dim % t == 0:
            best = t
        t += 128
    return best


def linear_relu_pallas(x, w, b, *, compute_dtype=None, tm_max=None, tn_max=None,
                       tk_max=None, vmem_limit_bytes=None):
    """y = relu(x @ w + b) with a tiled, K-reduced Pallas matmul.

    Weights prepared via prepare_params need no per-call padding; raw
    (unaligned) weights are padded here as a fallback."""
    M, K = x.shape
    Kw, N = w.shape
    compute_dtype = compute_dtype or w.dtype
    b2d = b if b.ndim == 2 else b.reshape(1, -1)

    # Generation-aware tile caps: bigger tiles on 128 MiB VMEM chips.
    if tm_max is None:
        tm_max = 512 if _BIG_VMEM else 256
    if tn_max is None:
        tn_max = 1024 if _BIG_VMEM else 512
    if tk_max is None:
        tk_max = 1024 if _BIG_VMEM else 512

    Kp = _round_up(max(K, Kw), 128)
    Np = _round_up(N, 128)
    tm = min(tm_max, _round_up(M, 8))
    Mp = _round_up(M, tm)
    tk = _pick_divisor_tile(Kp, tk_max)
    tn = _pick_divisor_tile(Np, tn_max)

    xp = jnp.pad(x, ((0, Mp - M), (0, Kp - K))) if (Mp, Kp) != (M, K) else x
    wp = jnp.pad(w, ((0, Kp - Kw), (0, Np - N))) if (Kp, Np) != (Kw, N) else w
    bp = (jnp.pad(b2d, ((0, 0), (0, Np - b2d.shape[1])))
          if b2d.shape[1] != Np else b2d)

    kernel = functools.partial(_linear_relu_kernel, compute_dtype=compute_dtype)

    out = pl.pallas_call(
        kernel,
        out_shape=jax.ShapeDtypeStruct((Mp, Np), x.dtype),
        grid_spec=pltpu.PrefetchScalarGridSpec(
            num_scalar_prefetch=0,
            grid=(Mp // tm, Np // tn, Kp // tk),
            in_specs=[
                pl.BlockSpec((tm, tk), lambda i, j, k: (i, k)),   # x tile
                pl.BlockSpec((tk, tn), lambda i, j, k: (k, j)),   # w tile
                pl.BlockSpec((1, tn), lambda i, j, k: (0, j)),    # bias tile
            ],
            out_specs=pl.BlockSpec((tm, tn), lambda i, j, k: (i, j)),
            scratch_shapes=[pltpu.VMEM((tm, tn), jnp.float32)],
        ),
        compiler_params=pltpu.CompilerParams(
            dimension_semantics=("parallel", "parallel", "arbitrary"),
            vmem_limit_bytes=vmem_limit_bytes or _VMEM_LIMIT,
        ),
    )(xp, wp, bp)
    return out[:M, :N] if (Mp, Np) != (M, N) else out


# ---------------------------------------------------------------------------
# MLPBlock forward
# ---------------------------------------------------------------------------
def mlp_block_forward(x, prepared, *, compute_dtype=None):
    """Forward pass of MLPBlock: Linear then ReLU for every layer.

    Fuses the longest consecutive layer groups that fit the per-chip VMEM
    budget into single kernels (intermediates stay in VMEM); a single layer
    too large for residency uses the tiled K-reduction fallback kernel."""
    layers = prepared["layers"]
    in_size = prepared["in_size"]
    padded_in = prepared["padded_in"]
    out_size = prepared["out_size"]
    compute_dtype = compute_dtype or layers[0][0].dtype

    M = x.shape[0]
    assert x.shape[1] == in_size
    if padded_in != in_size:                      # feature pad for layer 0 only
        x = jnp.pad(x, ((0, 0), (0, padded_in - in_size)))

    widest = max(padded_in, max(w.shape[1] for w, _ in layers))
    tm = _pick_batch_tile(M, widest)
    itemsize = jnp.dtype(x.dtype).itemsize

    h = x
    i = 0
    while i < len(layers):
        j = i + 1
        while (j < len(layers)
               and _fused_group_bytes(h.shape[1], layers[i:j + 1], tm, itemsize)
               <= _FUSED_BUDGET):
            j += 1
        if _fused_group_bytes(h.shape[1], layers[i:j], tm, itemsize) <= _FUSED_BUDGET:
            h = mlp_fused_pallas(h, layers[i:j], compute_dtype=compute_dtype, tm=tm)
            i = j
        else:
            w, b = layers[i]                      # oversized single layer
            h = linear_relu_pallas(h, w, b, compute_dtype=compute_dtype)
            i += 1
    return h[:, :out_size] if h.shape[1] != out_size else h


def mlp_block_reference(x, params):
    """Pure-JAX reference (true f32 matmul) for correctness checking."""
    for w, b in params:
        x = jnp.maximum(
            jnp.dot(x, w, precision=jax.lax.Precision.HIGHEST) + b, 0.0)
    return x


# TODO(synk): NoisyLinear (enable_noisy_dense=True), non-ReLU activations and
# use_bias=False are not implemented; only the default Linear+ReLU path is
# reproduced.

if __name__ == "__main__":
    key = jax.random.PRNGKey(0)

    batch = 8
    in_size = 128
    layer_sizes = (256, 128)

    key, xk, pk = jax.random.split(key, 3)
    x = jax.random.normal(xk, (batch, in_size), dtype=jnp.float32)
    params = init_mlp_params(pk, in_size, layer_sizes)     # f32 "PyTorch" params
    ref = mlp_block_reference(x, params)

    # Main path: bf16 weights (MXU-native), f32 accumulation, fused kernel.
    prep_bf16 = prepare_params(params, param_dtype=jnp.bfloat16)
    out = jax.block_until_ready(mlp_block_forward(x, prep_bf16))
    assert out.shape == (batch, layer_sizes[-1])
    assert jnp.allclose(out, ref, atol=1e-1, rtol=1e-1), "bf16 fused mismatch vs reference"

    # Exact-ish f32 path through the same fused kernel.
    prep_f32 = prepare_params(params, param_dtype=jnp.float32)
    out_f32 = jax.block_until_ready(
        mlp_block_forward(x, prep_f32, compute_dtype=jnp.float32))
    assert jnp.allclose(out_f32, ref, atol=2e-2, rtol=2e-2), "f32 fused mismatch vs reference"

    # Exercise the tiled per-layer fallback kernel directly (raw f32 weights).
    out_tiled = x
    for w, b in params:
        out_tiled = linear_relu_pallas(out_tiled, w, b, compute_dtype=jnp.float32)
    out_tiled = jax.block_until_ready(out_tiled)
    assert jnp.allclose(out_tiled, ref, atol=2e-2, rtol=2e-2), "tiled mismatch vs reference"

    print("KERNEL_OK")
</pallas_src>

<mosaic_0001>
module attributes {stable_mosaic.version = 11 : i64} {
  func.func @_fused_mlp_kernel(%arg0: i32, %arg1: memref<8x128xf32, #tpu.memory_space<vmem>>, %arg2: memref<128x256xbf16, #tpu.memory_space<vmem>>, %arg3: memref<1x256xf32, #tpu.memory_space<vmem>>, %arg4: memref<256x128xbf16, #tpu.memory_space<vmem>>, %arg5: memref<1x128xf32, #tpu.memory_space<vmem>>, %arg6: memref<8x128xf32, #tpu.memory_space<vmem>>) attributes {dimension_semantics = [#tpu.dimension_semantics<parallel>], iteration_bounds = array<i64: 1>, scalar_prefetch = 0 : i64, scratch_operands = 0 : i64, tpu.core_type = #tpu.core_type<tc>, window_params = [{transform_indices = @transform_0, window_bounds = array<i64: 8, 128>}, {pipeline_mode = #tpu.pipeline_mode<synchronous>, transform_indices = @transform_1, window_bounds = array<i64: 128, 256>}, {pipeline_mode = #tpu.pipeline_mode<synchronous>, transform_indices = @transform_2, window_bounds = array<i64: 1, 256>}, {pipeline_mode = #tpu.pipeline_mode<synchronous>, transform_indices = @transform_3, window_bounds = array<i64: 256, 128>}, {pipeline_mode = #tpu.pipeline_mode<synchronous>, transform_indices = @transform_4, window_bounds = array<i64: 1, 128>}, {transform_indices = @transform_5, window_bounds = array<i64: 8, 128>}]} {
    %c0 = arith.constant 0 : index
    %c0_0 = arith.constant 0 : index
    %0 = vector.load %arg1[%c0, %c0_0] : memref<8x128xf32, #tpu.memory_space<vmem>>, vector<8x128xf32>
    %1 = arith.truncf %0 : vector<8x128xf32> to vector<8x128xbf16>
    %c0_1 = arith.constant 0 : index
    %c0_2 = arith.constant 0 : index
    %2 = vector.load %arg2[%c0_1, %c0_2] : memref<128x256xbf16, #tpu.memory_space<vmem>>, vector<128x256xbf16>
    %cst = arith.constant dense<0.000000e+00> : vector<8x256xf32>
    %3 = tpu.matmul %1, %2, %cst {dimension_numbers = #tpu.dot_dimension_numbers<[1], [0], [0], [1], [0, 0, 1, 1], [], []>} : vector<8x128xbf16>, vector<128x256xbf16>, vector<8x256xf32> -> vector<8x256xf32>
    %c0_3 = arith.constant 0 : index
    %c0_4 = arith.constant 0 : index
    %4 = vector.load %arg3[%c0_3, %c0_4] : memref<1x256xf32, #tpu.memory_space<vmem>>, vector<1x256xf32>
    %5 = vector.broadcast %4 : vector<1x256xf32> to vector<8x256xf32>
    %6 = arith.addf %3, %5 : vector<8x256xf32>
    %cst_5 = arith.constant 0.000000e+00 : f32
    %7 = vector.broadcast %cst_5 : f32 to vector<8x256xf32>
    %8 = arith.maximumf %6, %7 : vector<8x256xf32>
    %9 = arith.truncf %8 : vector<8x256xf32> to vector<8x256xbf16>
    %c0_6 = arith.constant 0 : index
    %c0_7 = arith.constant 0 : index
    %10 = vector.load %arg4[%c0_6, %c0_7] : memref<256x128xbf16, #tpu.memory_space<vmem>>, vector<256x128xbf16>
    %cst_8 = arith.constant dense<0.000000e+00> : vector<8x128xf32>
    %11 = tpu.matmul %9, %10, %cst_8 {dimension_numbers = #tpu.dot_dimension_numbers<[1], [0], [0], [1], [0, 0, 1, 1], [], []>} : vector<8x256xbf16>, vector<256x128xbf16>, vector<8x128xf32> -> vector<8x128xf32>
    %c0_9 = arith.constant 0 : index
    %c0_10 = arith.constant 0 : index
    %12 = vector.load %arg5[%c0_9, %c0_10] : memref<1x128xf32, #tpu.memory_space<vmem>>, vector<1x128xf32>
    %13 = vector.broadcast %12 : vector<1x128xf32> to vector<8x128xf32>
    %14 = arith.addf %11, %13 : vector<8x128xf32>
    %cst_11 = arith.constant 0.000000e+00 : f32
    %15 = vector.broadcast %cst_11 : f32 to vector<8x128xf32>
    %16 = arith.maximumf %14, %15 : vector<8x128xf32>
    %c0_12 = arith.constant 0 : index
    %c0_13 = arith.constant 0 : index
    %17 = vector.load %arg6[%c0_12, %c0_13] : memref<8x128xf32, #tpu.memory_space<vmem>>, vector<8x128xf32>
    tpu.vector_store %arg6[%c0_12, %c0_13], %16 {strides = array<i32>} : memref<8x128xf32, #tpu.memory_space<vmem>>, vector<8x128xf32>,
    return
  }
  func.func @transform_0(%arg0: i32) -> (i32, i32) {
    %c0_i32 = arith.constant 0 : i32
    %c0_i32_0 = arith.constant 0 : i32
    return %arg0, %c0_i32 : i32, i32
  }
  func.func @transform_1(%arg0: i32) -> (i32, i32) {
    %c0_i32 = arith.constant 0 : i32
    %c0_i32_0 = arith.constant 0 : i32
    %c0_i32_1 = arith.constant 0 : i32
    return %c0_i32, %c0_i32_0 : i32, i32
  }
  func.func @transform_2(%arg0: i32) -> (i32, i32) {
    %c0_i32 = arith.constant 0 : i32
    %c0_i32_0 = arith.constant 0 : i32
    %c0_i32_1 = arith.constant 0 : i32
    return %c0_i32, %c0_i32_0 : i32, i32
  }
  func.func @transform_3(%arg0: i32) -> (i32, i32) {
    %c0_i32 = arith.constant 0 : i32
    %c0_i32_0 = arith.constant 0 : i32
    %c0_i32_1 = arith.constant 0 : i32
    return %c0_i32, %c0_i32_0 : i32, i32
  }
  func.func @transform_4(%arg0: i32) -> (i32, i32) {
    %c0_i32 = arith.constant 0 : i32
    %c0_i32_0 = arith.constant 0 : i32
    %c0_i32_1 = arith.constant 0 : i32
    return %c0_i32, %c0_i32_0 : i32, i32
  }
  func.func @transform_5(%arg0: i32) -> (i32, i32) {
    %c0_i32 = arith.constant 0 : i32
    %c0_i32_0 = arith.constant 0 : i32
    return %arg0, %c0_i32 : i32, i32
  }
}

module attributes {stable_mosaic.version = 11 : i64} {
  func.func @_fused_mlp_kernel(%arg0: i32, %arg1: memref<8x128xf32, #tpu.memory_space<vmem>>, %arg2: memref<128x256xbf16, #tpu.memory_space<vmem>>, %arg3: memref<1x256xf32, #tpu.memory_space<vmem>>, %arg4: memref<256x128xbf16, #tpu.memory_space<vmem>>, %arg5: memref<1x128xf32, #tpu.memory_space<vmem>>, %arg6: memref<8x128xf32, #tpu.memory_space<vmem>>) attributes {dimension_semantics = [#tpu.dimension_semantics<parallel>], iteration_bounds = array<i64: 1>, scalar_prefetch = 0 : i64, scratch_operands = 0 : i64, tpu.core_type = #tpu.core_type<tc>, window_params = [{transform_indices = @transform_0, window_bounds = array<i64: 8, 128>}, {pipeline_mode = #tpu.pipeline_mode<synchronous>, transform_indices = @transform_1, window_bounds = array<i64: 128, 256>}, {pipeline_mode = #tpu.pipeline_mode<synchronous>, transform_indices = @transform_2, window_bounds = array<i64: 1, 256>}, {pipeline_mode = #tpu.pipeline_mode<synchronous>, transform_indices = @transform_3, window_bounds = array<i64: 256, 128>}, {pipeline_mode = #tpu.pipeline_mode<synchronous>, transform_indices = @transform_4, window_bounds = array<i64: 1, 128>}, {transform_indices = @transform_5, window_bounds = array<i64: 8, 128>}]} {
    %c0 = arith.constant 0 : index
    %c0_0 = arith.constant 0 : index
    %0 = vector.load %arg1[%c0, %c0_0] : memref<8x128xf32, #tpu.memory_space<vmem>>, vector<8x128xf32>
    %1 = arith.truncf %0 : vector<8x128xf32> to vector<8x128xbf16>
    %c0_1 = arith.constant 0 : index
    %c0_2 = arith.constant 0 : index
    %2 = vector.load %arg2[%c0_1, %c0_2] : memref<128x256xbf16, #tpu.memory_space<vmem>>, vector<128x256xbf16>
    %cst = arith.constant dense<0.000000e+00> : vector<8x256xf32>
    %3 = tpu.matmul %1, %2, %cst {dimension_numbers = #tpu.dot_dimension_numbers<[1], [0], [0], [1], [0, 0, 1, 1], [], []>} : vector<8x128xbf16>, vector<128x256xbf16>, vector<8x256xf32> -> vector<8x256xf32>
    %c0_3 = arith.constant 0 : index
    %c0_4 = arith.constant 0 : index
    %4 = vector.load %arg3[%c0_3, %c0_4] : memref<1x256xf32, #tpu.memory_space<vmem>>, vector<1x256xf32>
    %5 = vector.broadcast %4 : vector<1x256xf32> to vector<8x256xf32>
    %6 = arith.addf %3, %5 : vector<8x256xf32>
    %cst_5 = arith.constant 0.000000e+00 : f32
    %7 = vector.broadcast %cst_5 : f32 to vector<8x256xf32>
    %8 = arith.maximumf %6, %7 : vector<8x256xf32>
    %9 = arith.truncf %8 : vector<8x256xf32> to vector<8x256xbf16>
    %c0_6 = arith.constant 0 : index
    %c0_7 = arith.constant 0 : index
    %10 = vector.load %arg4[%c0_6, %c0_7] : memref<256x128xbf16, #tpu.memory_space<vmem>>, vector<256x128xbf16>
    %cst_8 = arith.constant dense<0.000000e+00> : vector<8x128xf32>
    %11 = tpu.matmul %9, %10, %cst_8 {dimension_numbers = #tpu.dot_dimension_numbers<[1], [0], [0], [1], [0, 0, 1, 1], [], []>} : vector<8x256xbf16>, vector<256x128xbf16>, vector<8x128xf32> -> vector<8x128xf32>
    %c0_9 = arith.constant 0 : index
    %c0_10 = arith.constant 0 : index
    %12 = vector.load %arg5[%c0_9, %c0_10] : memref<1x128xf32, #tpu.memory_space<vmem>>, vector<1x128xf32>
    %13 = vector.broadcast %12 : vector<1x128xf32> to vector<8x128xf32>
    %14 = arith.addf %11, %13 : vector<8x128xf32>
    %cst_11 = arith.constant 0.000000e+00 : f32
    %15 = vector.broadcast %cst_11 : f32 to vector<8x128xf32>
    %16 = arith.maximumf %14, %15 : vector<8x128xf32>
    %c0_12 = arith.constant 0 : index
    %c0_13 = arith.constant 0 : index
    %17 = vector.load %arg6[%c0_12, %c0_13] : memref<8x128xf32, #tpu.memory_space<vmem>>, vector<8x128xf32>
    tpu.vector_store %arg6[%c0_12, %c0_13], %16 {strides = array<i32>} : memref<8x128xf32, #tpu.memory_space<vmem>>, vector<8x128xf32>,
    return
  }
  func.func @transform_0(%arg0: i32) -> (i32, i32) {
    %c0_i32 = arith.constant 0 : i32
    %c0_i32_0 = arith.constant 0 : i32
    return %arg0, %c0_i32 : i32, i32
  }
  func.func @transform_1(%arg0: i32) -> (i32, i32) {
    %c0_i32 = arith.constant 0 : i32
    %c0_i32_0 = arith.constant 0 : i32
    %c0_i32_1 = arith.constant 0 : i32
    return %c0_i32, %c0_i32_0 : i32, i32
  }
  func.func @transform_2(%arg0: i32) -> (i32, i32) {
    %c0_i32 = arith.constant 0 : i32
    %c0_i32_0 = arith.constant 0 : i32
    %c0_i32_1 = arith.constant 0 : i32
    return %c0_i32, %c0_i32_0 : i32, i32
  }
  func.func @transform_3(%arg0: i32) -> (i32, i32) {
    %c0_i32 = arith.constant 0 : i32
    %c0_i32_0 = arith.constant 0 : i32
    %c0_i32_1 = arith.constant 0 : i32
    return %c0_i32, %c0_i32_0 : i32, i32
  }
  func.func @transform_4(%arg0: i32) -> (i32, i32) {
    %c0_i32 = arith.constant 0 : i32
    %c0_i32_0 = arith.constant 0 : i32
    %c0_i32_1 = arith.constant 0 : i32
    return %c0_i32, %c0_i32_0 : i32, i32
  }
  func.func @transform_5(%arg0: i32) -> (i32, i32) {
    %c0_i32 = arith.constant 0 : i32
    %c0_i32_0 = arith.constant 0 : i32
    return %arg0, %c0_i32 : i32, i32
  }
}

</mosaic_0001>

<llo_original>
// kernel: tpu_custom_call.1
$region0: #{tpu_custom_call.1}
  #allocation0 [shape = 'u32[]', space=smem, size = 0x4, offset = 0x4, fixed_abs, tag = 'smem constant byte address 0x4 - core index']
  #allocation1 [shape = 'u32[144,128]{1,0:T(1,128)}', space=vmem, size = 0x12000, scoped, tag = 'internal scratch']
  %s0 = inlined_call_operand.hbm [shape: f32[8,128], index: 0, kind: input, shape index: {}]
  %s1 = inlined_call_operand.hbm [shape: bf16[128,256], index: 1, kind: input, shape index: {}]
  %s2 = inlined_call_operand.vmem [shape: f32[1,256], index: 2, kind: input, shape index: {}]
  %s3 = inlined_call_operand.hbm [shape: bf16[256,128], index: 3, kind: input, shape index: {}]
  %s4 = inlined_call_operand.vmem [shape: f32[1,128], index: 4, kind: input, shape index: {}]
  %s5 = inlined_call_operand.hbm [shape: f32[8,128], index: 5, kind: output, shape index: {}]
  %s6 = sld [smem:[#allocation0]]
  $region42: #{tpu_custom_call.1} parent=0
    _
  %s8 = ssub.s32 1, %s6
  %s9 = scalar_select 0, %s8, %s6
  $region1: #{tpu_custom_call.1} parent=0
    #allocation2 [shape = 'u8[4096]{0}', space=vmem, size = 0x1000, scoped, tag = 'input window, operand 0, single buffered']
    #allocation3 [shape = 's32[1]{0}', space=sflag, size = 0x4, scoped, tag = 'scoped memory for tpu_custom_call.1']
    #allocation4 [shape = 's32[1]{0}', space=sflag, size = 0x4, scoped, tag = 'scoped memory for tpu_custom_call.1']
    #allocation5 [shape = 'u8[65536]{0}', space=vmem, size = 0x10000, scoped, tag = 'input window, operand 1, single buffered']
    #allocation6 [shape = 's32[1]{0}', space=sflag, size = 0x4, scoped, tag = 'scoped memory for tpu_custom_call.1']
    #allocation7 [shape = 'u8[65536]{0}', space=vmem, size = 0x10000, scoped, tag = 'input window, operand 3, single buffered']
    #allocation8 [shape = 'u8[4096]{0}', space=vmem, size = 0x1000, scoped, tag = 'output window, operand 0, single buffered']
    %10 = vsyncpa [#allocation3], 0
    %11 = vsyncpa [#allocation6], 0
    %12 = vsyncpa [#allocation4], 0
    // Predicated region
    $region2: #{tpu_custom_call.1} parent=1 // pred_check
      _
    $region3: #{tpu_custom_call.1} parent=1 // pred_check_branch
      %14 = sbr.rel (0) target = $region5
    $region4: #{tpu_custom_call.1} parent=1 // pred_region
      %s16 = ssub.s32 128, 128
      %17 = vsyncadd [#allocation3], %s16
      %s19 = sshll.u32 [#allocation2], 4
      %s20 = int_to_ptr.vmem [resolvable:$true] %s19
      %22 = dma.hbm_to_vmem [thread:$0]  %s0, 128, %s20, [#allocation3]
    $region5: #{tpu_custom_call.1} parent=1 // pred_fallthru
      _
    // Predicated region
    $region6: #{tpu_custom_call.1} parent=1 // pred_check
      _
    $region7: #{tpu_custom_call.1} parent=1 // pred_check_branch
      %24 = sbr.rel (0) target = $region9
    $region8: #{tpu_custom_call.1} parent=1 // pred_region
      %s26 = ssub.s32 2048, 2048
      %27 = vsyncadd [#allocation6], %s26
      %s28 = sshll.u32 [#allocation5], 4
      %s29 = int_to_ptr.vmem [resolvable:$true] %s28
      %34 = dma.hbm_to_vmem [thread:$0]  %s1, 2048, %s29, [#allocation6], 128, 128, 8
    $region9: #{tpu_custom_call.1} parent=1 // pred_fallthru
      _
    // Predicated region
    $region10: #{tpu_custom_call.1} parent=1 // pred_check
      _
    $region11: #{tpu_custom_call.1} parent=1 // pred_check_branch
      %36 = sbr.rel (0) target = $region13
    $region12: #{tpu_custom_call.1} parent=1 // pred_region
      _
    $region13: #{tpu_custom_call.1} parent=1 // pred_fallthru
      _
    // Predicated region
    $region14: #{tpu_custom_call.1} parent=1 // pred_check
      _
    $region15: #{tpu_custom_call.1} parent=1 // pred_check_branch
      %38 = sbr.rel (0) target = $region17
    $region16: #{tpu_custom_call.1} parent=1 // pred_region
      %s40 = ssub.s32 2048, 2048
      %41 = vsyncadd [#allocation6], %s40
      %s42 = sshll.u32 [#allocation7], 4
      %s43 = int_to_ptr.vmem [resolvable:$true] %s42
      %48 = dma.hbm_to_vmem [thread:$0]  %s3, 2048, %s43, [#allocation6], 64, 64, 4
    $region17: #{tpu_custom_call.1} parent=1 // pred_fallthru
      _
    // Predicated region
    $region18: #{tpu_custom_call.1} parent=1 // pred_check
      _
    $region19: #{tpu_custom_call.1} parent=1 // pred_check_branch
      %50 = sbr.rel (0) target = $region21
    $region20: #{tpu_custom_call.1} parent=1 // pred_region
      _
    $region21: #{tpu_custom_call.1} parent=1 // pred_fallthru
      _
    // Predicated region
    $region22: #{tpu_custom_call.1} parent=1 // pred_check
      _
    $region23: #{tpu_custom_call.1} parent=1 // pred_check_branch
      %52 = sbr.rel (0) target = $region25
    $region24: #{tpu_custom_call.1} parent=1 // pred_region
      %53 = dma.done [#allocation3], 128
    $region25: #{tpu_custom_call.1} parent=1 // pred_fallthru
      _
    // Predicated region
    $region26: #{tpu_custom_call.1} parent=1 // pred_check
      _
    $region27: #{tpu_custom_call.1} parent=1 // pred_check_branch
      %55 = sbr.rel (0) target = $region29
    $region28: #{tpu_custom_call.1} parent=1 // pred_region
      %56 = dma.done [#allocation6], 2048
    $region29: #{tpu_custom_call.1} parent=1 // pred_fallthru
      _
    // Predicated region
    $region30: #{tpu_custom_call.1} parent=1 // pred_check
      _
    $region31: #{tpu_custom_call.1} parent=1 // pred_check_branch
      %58 = sbr.rel (0) target = $region33
    $region32: #{tpu_custom_call.1} parent=1 // pred_region
      %59 = dma.done [#allocation6], 2048
    $region33: #{tpu_custom_call.1} parent=1 // pred_fallthru
      _
    %v61 = vld [vmem:[#allocation2] sm:$0xff]
    %v62 = vpack.c.bf16 %v61, %v61
    %v63 = vld [vmem:[#allocation5] sm:$0xff]
    %v64 = vld [vmem:[#allocation5 + $0x8] sm:$0xff]
    %v65 = vld [vmem:[#allocation5 + $0x10] sm:$0xff]
    %v66 = vld [vmem:[#allocation5 + $0x18] sm:$0xff]
    %v67 = vld [vmem:[#allocation5 + $0x20] sm:$0xff]
    %v68 = vld [vmem:[#allocation5 + $0x28] sm:$0xff]
    %v69 = vld [vmem:[#allocation5 + $0x30] sm:$0xff]
    %v70 = vld [vmem:[#allocation5 + $0x38] sm:$0xff]
    %v71 = vld [vmem:[#allocation5 + $0x40] sm:$0xff]
    %v72 = vld [vmem:[#allocation5 + $0x48] sm:$0xff]
    %v73 = vld [vmem:[#allocation5 + $0x50] sm:$0xff]
    %v74 = vld [vmem:[#allocation5 + $0x58] sm:$0xff]
    %v75 = vld [vmem:[#allocation5 + $0x60] sm:$0xff]
    %v76 = vld [vmem:[#allocation5 + $0x68] sm:$0xff]
    %v77 = vld [vmem:[#allocation5 + $0x70] sm:$0xff]
    %v78 = vld [vmem:[#allocation5 + $0x78] sm:$0xff]
    %v79 = vld [vmem:[%s2] sm:$0x3]
    %v81 = vlaneseq
    %v82 = vshrl.u32 %v81, 7
    %v83 = vsub.s32 0, %v82
    %v84 = vrot.slane %v79, %v83
    %v85 = vlaneseq
    %v86 = vshrl.u32 %v85, 7
    %v87 = vsub.s32 1, %v86
    %v88 = vrot.slane %v79, %v87
    %v107 = vunpack.c.l.b16 %v63
    %v108 = vunpack.c.h.b16 %v63
    %v109 = vunpack.c.l.b16 %v64
    %v110 = vunpack.c.h.b16 %v64
    %v111 = vunpack.c.l.b16 %v65
    %v112 = vunpack.c.h.b16 %v65
    %v113 = vunpack.c.l.b16 %v66
    %v114 = vunpack.c.h.b16 %v66
    %v115 = vunpack.c.l.b16 %v67
    %v116 = vunpack.c.h.b16 %v67
    %v117 = vunpack.c.l.b16 %v68
    %v118 = vunpack.c.h.b16 %v68
    %v119 = vunpack.c.l.b16 %v69
    %v120 = vunpack.c.h.b16 %v69
    %v121 = vunpack.c.l.b16 %v70
    %v122 = vunpack.c.h.b16 %v70
    %v123 = vunpack.c.l.b16 %v71
    %v124 = vunpack.c.h.b16 %v71
    %v125 = vunpack.c.l.b16 %v72
    %v126 = vunpack.c.h.b16 %v72
    %v127 = vunpack.c.l.b16 %v73
    %v128 = vunpack.c.h.b16 %v73
    %v129 = vunpack.c.l.b16 %v74
    %v130 = vunpack.c.h.b16 %v74
    %v131 = vunpack.c.l.b16 %v75
    %v132 = vunpack.c.h.b16 %v75
    %v133 = vunpack.c.l.b16 %v76
    %v134 = vunpack.c.h.b16 %v76
    %v135 = vunpack.c.l.b16 %v77
    %v136 = vunpack.c.h.b16 %v77
    %v137 = vunpack.c.l.b16 %v78
    %v138 = vunpack.c.h.b16 %v78
    %v139 = vpack.c.b16 %v109, %v107
    %v140 = vpack.c.b16 %v110, %v108
    %v141 = vpack.c.b16 %v113, %v111
    %v142 = vpack.c.b16 %v114, %v112
    %v143 = vpack.c.b16 %v117, %v115
    %v144 = vpack.c.b16 %v118, %v116
    %v145 = vpack.c.b16 %v121, %v119
    %v146 = vpack.c.b16 %v122, %v120
    %v147 = vpack.c.b16 %v125, %v123
    %v148 = vpack.c.b16 %v126, %v124
    %v149 = vpack.c.b16 %v129, %v127
    %v150 = vpack.c.b16 %v130, %v128
    %v151 = vpack.c.b16 %v133, %v131
    %v152 = vpack.c.b16 %v134, %v132
    %v153 = vpack.c.b16 %v137, %v135
    %v154 = vpack.c.b16 %v138, %v136
    %171 = vmatprep.subr.bf16.mxu0 %v140
    %172 = vmatpush1.bf16.msra.mxu0 %v139
    %173 = vmatprep.subr.bf16.mxu0 %v142
    %174 = vmatpush1.bf16.msra.mxu0 %v141
    %175 = vmatprep.subr.bf16.mxu0 %v144
    %176 = vmatpush1.bf16.msra.mxu0 %v143
    %177 = vmatprep.subr.bf16.mxu0 %v146
    %178 = vmatpush1.bf16.msra.mxu0 %v145
    %179 = vmatprep.subr.bf16.mxu0 %v148
    %180 = vmatpush1.bf16.msra.mxu0 %v147
    %181 = vmatprep.subr.bf16.mxu0 %v150
    %182 = vmatpush1.bf16.msra.mxu0 %v149
    %183 = vmatprep.subr.bf16.mxu0 %v152
    %184 = vmatpush1.bf16.msra.mxu0 %v151
    %185 = vmatprep.subr.bf16.mxu0 %v154
    %186 = vmatpush1.bf16.msra.mxu0 %v153
    %187 = vmatprep.subr.bf16.mxu0 0
    %188 = vmatpush1.bf16.msra.mxu0 0
    %189 = vmatprep.subr.bf16.mxu0 0
    %190 = vmatpush1.bf16.msra.mxu0 0
    %191 = vmatprep.subr.bf16.mxu0 0
    %192 = vmatpush1.bf16.msra.mxu0 0
    %193 = vmatprep.subr.bf16.mxu0 0
    %194 = vmatpush1.bf16.msra.mxu0 0
    %195 = vmatprep.subr.bf16.mxu0 0
    %196 = vmatpush1.bf16.msra.mxu0 0
    %197 = vmatprep.subr.bf16.mxu0 0
    %198 = vmatpush1.bf16.msra.mxu0 0
    %199 = vmatprep.subr.bf16.mxu0 0
    %200 = vmatpush1.bf16.msra.mxu0 0
    %201 = vmatprep.subr.bf16.mxu0 0
    %202 = vmatpush1.bf16.msra.mxu0 0
    %203 = vmatprep.mubr.bf16.mxu0 0
    %204 = vmatmul.mubr.bf16.gmra.mrb[0].mxu0 %v62
    %v205 = vpop.f32.mrb[0].mxu0
    %v206 = vadd.f32 %v84, %v205
    %v207 = vpop.f32.mrb[0].mxu0
    %v208 = vadd.f32 %v88, %v207
    %v209 = vpop.f32.mrb[0].mxu0
    %v210 = vpop.f32.mrb[0].mxu0
    %211 = vdwg.mxu0
    %v212 = vmax.f32 %v206, 0.0
    %v213 = vmax.f32 %v208, 0.0
    %v214 = vpack.c.bf16 %v212, %v212
    %v215 = vpack.c.bf16 %v213, %v213
    %v216 = vld [vmem:[#allocation7] sm:$0xf]
    %v217 = vld [vmem:[#allocation7 + $0x4] sm:$0xf]
    %v218 = vld [vmem:[#allocation7 + $0x8] sm:$0xf]
    %v219 = vld [vmem:[#allocation7 + $0xc] sm:$0xf]
    %v220 = vld [vmem:[#allocation7 + $0x10] sm:$0xf]
    %v221 = vld [vmem:[#allocation7 + $0x14] sm:$0xf]
    %v222 = vld [vmem:[#allocation7 + $0x18] sm:$0xf]
    %v223 = vld [vmem:[#allocation7 + $0x1c] sm:$0xf]
    %v224 = vld [vmem:[#allocation7 + $0x20] sm:$0xf]
    %v225 = vld [vmem:[#allocation7 + $0x24] sm:$0xf]
    %v226 = vld [vmem:[#allocation7 + $0x28] sm:$0xf]
    %v227 = vld [vmem:[#allocation7 + $0x2c] sm:$0xf]
    %v228 = vld [vmem:[#allocation7 + $0x30] sm:$0xf]
    %v229 = vld [vmem:[#allocation7 + $0x34] sm:$0xf]
    %v230 = vld [vmem:[#allocation7 + $0x38] sm:$0xf]
    %v231 = vld [vmem:[#allocation7 + $0x3c] sm:$0xf]
    %v232 = vld [vmem:[#allocation7 + $0x40] sm:$0xf]
    %v233 = vld [vmem:[#allocation7 + $0x44] sm:$0xf]
    %v234 = vld [vmem:[#allocation7 + $0x48] sm:$0xf]
    %v235 = vld [vmem:[#allocation7 + $0x4c] sm:$0xf]
    %v236 = vld [vmem:[#allocation7 + $0x50] sm:$0xf]
    %v237 = vld [vmem:[#allocation7 + $0x54] sm:$0xf]
    %v238 = vld [vmem:[#allocation7 + $0x58] sm:$0xf]
    %v239 = vld [vmem:[#allocation7 + $0x5c] sm:$0xf]
    %v240 = vld [vmem:[#allocation7 + $0x60] sm:$0xf]
    %v241 = vld [vmem:[#allocation7 + $0x64] sm:$0xf]
    %v242 = vld [vmem:[#allocation7 + $0x68] sm:$0xf]
    %v243 = vld [vmem:[#allocation7 + $0x6c] sm:$0xf]
    %v244 = vld [vmem:[#allocation7 + $0x70] sm:$0xf]
    %v245 = vld [vmem:[#allocation7 + $0x74] sm:$0xf]
    %v246 = vld [vmem:[#allocation7 + $0x78] sm:$0xf]
    %v247 = vld [vmem:[#allocation7 + $0x7c] sm:$0xf]
    %v248 = vld [vmem:[%s4] sm:$0x1]
    %v250 = vlaneseq
    %v251 = vshrl.u32 %v250, 7
    %v252 = vsub.s32 0, %v251
    %v253 = vrot.slane %v248, %v252
    %v287 = vunpack.c.l.b16 %v216
    %v288 = vunpack.c.l.b16 %v217
    %v289 = vunpack.c.l.b16 %v218
    %v290 = vunpack.c.l.b16 %v219
    %v291 = vunpack.c.l.b16 %v220
    %v292 = vunpack.c.l.b16 %v221
    %v293 = vunpack.c.l.b16 %v222
    %v294 = vunpack.c.l.b16 %v223
    %v295 = vunpack.c.l.b16 %v224
    %v296 = vunpack.c.l.b16 %v225
    %v297 = vunpack.c.l.b16 %v226
    %v298 = vunpack.c.l.b16 %v227
    %v299 = vunpack.c.l.b16 %v228
    %v300 = vunpack.c.l.b16 %v229
    %v301 = vunpack.c.l.b16 %v230
    %v302 = vunpack.c.l.b16 %v231
    %v303 = vunpack.c.l.b16 %v232
    %v304 = vunpack.c.l.b16 %v233
    %v305 = vunpack.c.l.b16 %v234
    %v306 = vunpack.c.l.b16 %v235
    %v307 = vunpack.c.l.b16 %v236
    %v308 = vunpack.c.l.b16 %v237
    %v309 = vunpack.c.l.b16 %v238
    %v310 = vunpack.c.l.b16 %v239
    %v311 = vunpack.c.l.b16 %v240
    %v312 = vunpack.c.l.b16 %v241
    %v313 = vunpack.c.l.b16 %v242
    %v314 = vunpack.c.l.b16 %v243
    %v315 = vunpack.c.l.b16 %v244
    %v316 = vunpack.c.l.b16 %v245
    %v317 = vunpack.c.l.b16 %v246
    %v318 = vunpack.c.l.b16 %v247
    %v319 = vpack.c.b16 %v288, %v287
    %v320 = vpack.c.b16 %v290, %v289
    %v321 = vpack.c.b16 %v292, %v291
    %v322 = vpack.c.b16 %v294, %v293
    %v323 = vpack.c.b16 %v296, %v295
    %v324 = vpack.c.b16 %v298, %v297
    %v325 = vpack.c.b16 %v300, %v299
    %v326 = vpack.c.b16 %v302, %v301
    %v327 = vpack.c.b16 %v304, %v303
    %v328 = vpack.c.b16 %v306, %v305
    %v329 = vpack.c.b16 %v308, %v307
    %v330 = vpack.c.b16 %v310, %v309
    %v331 = vpack.c.b16 %v312, %v311
    %v332 = vpack.c.b16 %v314, %v313
    %v333 = vpack.c.b16 %v316, %v315
    %v334 = vpack.c.b16 %v318, %v317
    %351 = vmatprep.subr.bf16.mxu0 0
    %352 = vmatpush1.bf16.msra.mxu0 %v319
    %353 = vmatprep.subr.bf16.mxu0 0
    %354 = vmatpush1.bf16.msra.mxu0 %v320
    %355 = vmatprep.subr.bf16.mxu0 0
    %356 = vmatpush1.bf16.msra.mxu0 %v321
    %357 = vmatprep.subr.bf16.mxu0 0
    %358 = vmatpush1.bf16.msra.mxu0 %v322
    %359 = vmatprep.subr.bf16.mxu0 0
    %360 = vmatpush1.bf16.msra.mxu0 %v323
    %361 = vmatprep.subr.bf16.mxu0 0
    %362 = vmatpush1.bf16.msra.mxu0 %v324
    %363 = vmatprep.subr.bf16.mxu0 0
    %364 = vmatpush1.bf16.msra.mxu0 %v325
    %365 = vmatprep.subr.bf16.mxu0 0
    %366 = vmatpush1.bf16.msra.mxu0 %v326
    %367 = vmatprep.subr.bf16.mxu0 0
    %368 = vmatpush1.bf16.msra.mxu0 %v327
    %369 = vmatprep.subr.bf16.mxu0 0
    %370 = vmatpush1.bf16.msra.mxu0 %v328
    %371 = vmatprep.subr.bf16.mxu0 0
    %372 = vmatpush1.bf16.msra.mxu0 %v329
    %373 = vmatprep.subr.bf16.mxu0 0
    %374 = vmatpush1.bf16.msra.mxu0 %v330
    %375 = vmatprep.subr.bf16.mxu0 0
    %376 = vmatpush1.bf16.msra.mxu0 %v331
    %377 = vmatprep.subr.bf16.mxu0 0
    %378 = vmatpush1.bf16.msra.mxu0 %v332
    %379 = vmatprep.subr.bf16.mxu0 0
    %380 = vmatpush1.bf16.msra.mxu0 %v333
    %381 = vmatprep.subr.bf16.mxu0 0
    %382 = vmatpush1.bf16.msra.mxu0 %v334
    %383 = vmatprep.mubr.bf16.mxu0 %v215
    %384 = vmatmul.mubr.bf16.gmra.mrb[0].mxu0 %v214
    %v385 = vpop.f32.mrb[0].mxu0
    %v386 = vadd.f32 %v253, %v385
    %v387 = vpop.f32.mrb[0].mxu0
    %v388 = vpop.f32.mrb[0].mxu0
    %v389 = vpop.f32.mrb[0].mxu0
    %390 = vdwg.mxu0
    %v391 = vmax.f32 %v386, 0.0
    %392 = vst [vmem:[#allocation8] sm:$0xff] %v391
    // Predicated region
    $region34: #{tpu_custom_call.1} parent=1 // pred_check
      _
    $region35: #{tpu_custom_call.1} parent=1 // pred_check_branch
      %394 = sbr.rel (0) target = $region37
    $region36: #{tpu_custom_call.1} parent=1 // pred_region
      %s396 = ssub.s32 128, 128
      %397 = vsyncadd [#allocation4], %s396
      %s399 = sshll.u32 [#allocation8], 4
      %s400 = int_to_ptr.vmem [resolvable:$true] %s399
      %402 = dma.vmem_to_hbm [thread:$0]  %s400, 128, %s5, [#allocation4]
    $region37: #{tpu_custom_call.1} parent=1 // pred_fallthru
      _
    // Predicated region
    $region38: #{tpu_custom_call.1} parent=1 // pred_check
      _
    $region39: #{tpu_custom_call.1} parent=1 // pred_check_branch
      %404 = sbr.rel (0) target = $region41
    $region40: #{tpu_custom_call.1} parent=1 // pred_region
      %405 = dma.done [#allocation4], 128
    $region41: #{tpu_custom_call.1} parent=1 // pred_fallthru
      _
    %406 = vsyncpa [#allocation3], 1
    %407 = vsyncpa [#allocation6], 1
    %408 = vsyncpa [#allocation4], 1

// kernel: tpu_custom_call.1
$region0: #{tpu_custom_call.1}
  #allocation0 [shape = 'u32[]', space=smem, size = 0x4, offset = 0x4, fixed_abs, tag = 'smem constant byte address 0x4 - core index']
  #allocation1 [shape = 'u32[144,128]{1,0:T(1,128)}', space=vmem, size = 0x12000, scoped, tag = 'internal scratch']
  %s0 = inlined_call_operand.hbm [shape: f32[8,128], index: 0, kind: input, shape index: {}]
  %s1 = inlined_call_operand.hbm [shape: bf16[128,256], index: 1, kind: input, shape index: {}]
  %s2 = inlined_call_operand.vmem [shape: f32[1,256], index: 2, kind: input, shape index: {}]
  %s3 = inlined_call_operand.hbm [shape: bf16[256,128], index: 3, kind: input, shape index: {}]
  %s4 = inlined_call_operand.vmem [shape: f32[1,128], index: 4, kind: input, shape index: {}]
  %s5 = inlined_call_operand.hbm [shape: f32[8,128], index: 5, kind: output, shape index: {}]
  %s6 = sld [smem:[#allocation0]]
  $region42: #{tpu_custom_call.1} parent=0
    _
  %s8 = ssub.s32 1, %s6
  %s9 = scalar_select 0, %s8, %s6
  $region1: #{tpu_custom_call.1} parent=0
    #allocation2 [shape = 'u8[4096]{0}', space=vmem, size = 0x1000, scoped, tag = 'input window, operand 0, single buffered']
    #allocation3 [shape = 's32[1]{0}', space=sflag, size = 0x4, scoped, tag = 'scoped memory for tpu_custom_call.1']
    #allocation4 [shape = 's32[1]{0}', space=sflag, size = 0x4, scoped, tag = 'scoped memory for tpu_custom_call.1']
    #allocation5 [shape = 'u8[65536]{0}', space=vmem, size = 0x10000, scoped, tag = 'input window, operand 1, single buffered']
    #allocation6 [shape = 's32[1]{0}', space=sflag, size = 0x4, scoped, tag = 'scoped memory for tpu_custom_call.1']
    #allocation7 [shape = 'u8[65536]{0}', space=vmem, size = 0x10000, scoped, tag = 'input window, operand 3, single buffered']
    #allocation8 [shape = 'u8[4096]{0}', space=vmem, size = 0x1000, scoped, tag = 'output window, operand 0, single buffered']
    %10 = vsyncpa [#allocation3], 0
    %11 = vsyncpa [#allocation6], 0
    %12 = vsyncpa [#allocation4], 0
    // Predicated region
    $region2: #{tpu_custom_call.1} parent=1 // pred_check
      _
    $region3: #{tpu_custom_call.1} parent=1 // pred_check_branch
      %14 = sbr.rel (0) target = $region5
    $region4: #{tpu_custom_call.1} parent=1 // pred_region
      %s16 = ssub.s32 128, 128
      %17 = vsyncadd [#allocation3], %s16
      %s19 = sshll.u32 [#allocation2], 4
      %s20 = int_to_ptr.vmem [resolvable:$true] %s19
      %22 = dma.hbm_to_vmem [thread:$0]  %s0, 128, %s20, [#allocation3]
    $region5: #{tpu_custom_call.1} parent=1 // pred_fallthru
      _
    // Predicated region
    $region6: #{tpu_custom_call.1} parent=1 // pred_check
      _
    $region7: #{tpu_custom_call.1} parent=1 // pred_check_branch
      %24 = sbr.rel (0) target = $region9
    $region8: #{tpu_custom_call.1} parent=1 // pred_region
      %s26 = ssub.s32 2048, 2048
      %27 = vsyncadd [#allocation6], %s26
      %s28 = sshll.u32 [#allocation5], 4
      %s29 = int_to_ptr.vmem [resolvable:$true] %s28
      %34 = dma.hbm_to_vmem [thread:$0]  %s1, 2048, %s29, [#allocation6], 128, 128, 8
    $region9: #{tpu_custom_call.1} parent=1 // pred_fallthru
      _
    // Predicated region
    $region10: #{tpu_custom_call.1} parent=1 // pred_check
      _
    $region11: #{tpu_custom_call.1} parent=1 // pred_check_branch
      %36 = sbr.rel (0) target = $region13
    $region12: #{tpu_custom_call.1} parent=1 // pred_region
      _
    $region13: #{tpu_custom_call.1} parent=1 // pred_fallthru
      _
    // Predicated region
    $region14: #{tpu_custom_call.1} parent=1 // pred_check
      _
    $region15: #{tpu_custom_call.1} parent=1 // pred_check_branch
      %38 = sbr.rel (0) target = $region17
    $region16: #{tpu_custom_call.1} parent=1 // pred_region
      %s40 = ssub.s32 2048, 2048
      %41 = vsyncadd [#allocation6], %s40
      %s42 = sshll.u32 [#allocation7], 4
      %s43 = int_to_ptr.vmem [resolvable:$true] %s42
      %48 = dma.hbm_to_vmem [thread:$0]  %s3, 2048, %s43, [#allocation6], 64, 64, 4
    $region17: #{tpu_custom_call.1} parent=1 // pred_fallthru
      _
    // Predicated region
    $region18: #{tpu_custom_call.1} parent=1 // pred_check
      _
    $region19: #{tpu_custom_call.1} parent=1 // pred_check_branch
      %50 = sbr.rel (0) target = $region21
    $region20: #{tpu_custom_call.1} parent=1 // pred_region
      _
    $region21: #{tpu_custom_call.1} parent=1 // pred_fallthru
      _
    // Predicated region
    $region22: #{tpu_custom_call.1} parent=1 // pred_check
      _
    $region23: #{tpu_custom_call.1} parent=1 // pred_check_branch
      %52 = sbr.rel (0) target = $region25
    $region24: #{tpu_custom_call.1} parent=1 // pred_region
      %53 = dma.done [#allocation3], 128
    $region25: #{tpu_custom_call.1} parent=1 // pred_fallthru
      _
    // Predicated region
    $region26: #{tpu_custom_call.1} parent=1 // pred_check
      _
    $region27: #{tpu_custom_call.1} parent=1 // pred_check_branch
      %55 = sbr.rel (0) target = $region29
    $region28: #{tpu_custom_call.1} parent=1 // pred_region
      %56 = dma.done [#allocation6], 2048
    $region29: #{tpu_custom_call.1} parent=1 // pred_fallthru
      _
    // Predicated region
    $region30: #{tpu_custom_call.1} parent=1 // pred_check
      _
    $region31: #{tpu_custom_call.1} parent=1 // pred_check_branch
      %58 = sbr.rel (0) target = $region33
    $region32: #{tpu_custom_call.1} parent=1 // pred_region
      %59 = dma.done [#allocation6], 2048
    $region33: #{tpu_custom_call.1} parent=1 // pred_fallthru
      _
    %v61 = vld [vmem:[#allocation2] sm:$0xff]
    %v62 = vpack.c.bf16 %v61, %v61
    %v63 = vld [vmem:[#allocation5] sm:$0xff]
    %v64 = vld [vmem:[#allocation5 + $0x8] sm:$0xff]
    %v65 = vld [vmem:[#allocation5 + $0x10] sm:$0xff]
    %v66 = vld [vmem:[#allocation5 + $0x18] sm:$0xff]
    %v67 = vld [vmem:[#allocation5 + $0x20] sm:$0xff]
    %v68 = vld [vmem:[#allocation5 + $0x28] sm:$0xff]
    %v69 = vld [vmem:[#allocation5 + $0x30] sm:$0xff]
    %v70 = vld [vmem:[#allocation5 + $0x38] sm:$0xff]
    %v71 = vld [vmem:[#allocation5 + $0x40] sm:$0xff]
    %v72 = vld [vmem:[#allocation5 + $0x48] sm:$0xff]
    %v73 = vld [vmem:[#allocation5 + $0x50] sm:$0xff]
    %v74 = vld [vmem:[#allocation5 + $0x58] sm:$0xff]
    %v75 = vld [vmem:[#allocation5 + $0x60] sm:$0xff]
    %v76 = vld [vmem:[#allocation5 + $0x68] sm:$0xff]
    %v77 = vld [vmem:[#allocation5 + $0x70] sm:$0xff]
    %v78 = vld [vmem:[#allocation5 + $0x78] sm:$0xff]
    %v79 = vld [vmem:[%s2] sm:$0x3]
    %v81 = vlaneseq
    %v82 = vshrl.u32 %v81, 7
    %v83 = vsub.s32 0, %v82
    %v84 = vrot.slane %v79, %v83
    %v85 = vlaneseq
    %v86 = vshrl.u32 %v85, 7
    %v87 = vsub.s32 1, %v86
    %v88 = vrot.slane %v79, %v87
    %v107 = vunpack.c.l.b16 %v63
    %v108 = vunpack.c.h.b16 %v63
    %v109 = vunpack.c.l.b16 %v64
    %v110 = vunpack.c.h.b16 %v64
    %v111 = vunpack.c.l.b16 %v65
    %v112 = vunpack.c.h.b16 %v65
    %v113 = vunpack.c.l.b16 %v66
    %v114 = vunpack.c.h.b16 %v66
    %v115 = vunpack.c.l.b16 %v67
    %v116 = vunpack.c.h.b16 %v67
    %v117 = vunpack.c.l.b16 %v68
    %v118 = vunpack.c.h.b16 %v68
    %v119 = vunpack.c.l.b16 %v69
    %v120 = vunpack.c.h.b16 %v69
    %v121 = vunpack.c.l.b16 %v70
    %v122 = vunpack.c.h.b16 %v70
    %v123 = vunpack.c.l.b16 %v71
    %v124 = vunpack.c.h.b16 %v71
    %v125 = vunpack.c.l.b16 %v72
    %v126 = vunpack.c.h.b16 %v72
    %v127 = vunpack.c.l.b16 %v73
    %v128 = vunpack.c.h.b16 %v73
    %v129 = vunpack.c.l.b16 %v74
    %v130 = vunpack.c.h.b16 %v74
    %v131 = vunpack.c.l.b16 %v75
    %v132 = vunpack.c.h.b16 %v75
    %v133 = vunpack.c.l.b16 %v76
    %v134 = vunpack.c.h.b16 %v76
    %v135 = vunpack.c.l.b16 %v77
    %v136 = vunpack.c.h.b16 %v77
    %v137 = vunpack.c.l.b16 %v78
    %v138 = vunpack.c.h.b16 %v78
    %v139 = vpack.c.b16 %v109, %v107
    %v140 = vpack.c.b16 %v110, %v108
    %v141 = vpack.c.b16 %v113, %v111
    %v142 = vpack.c.b16 %v114, %v112
    %v143 = vpack.c.b16 %v117, %v115
    %v144 = vpack.c.b16 %v118, %v116
    %v145 = vpack.c.b16 %v121, %v119
    %v146 = vpack.c.b16 %v122, %v120
    %v147 = vpack.c.b16 %v125, %v123
    %v148 = vpack.c.b16 %v126, %v124
    %v149 = vpack.c.b16 %v129, %v127
    %v150 = vpack.c.b16 %v130, %v128
    %v151 = vpack.c.b16 %v133, %v131
    %v152 = vpack.c.b16 %v134, %v132
    %v153 = vpack.c.b16 %v137, %v135
    %v154 = vpack.c.b16 %v138, %v136
    %171 = vmatprep.subr.bf16.mxu0 %v140
    %172 = vmatpush1.bf16.msra.mxu0 %v139
    %173 = vmatprep.subr.bf16.mxu0 %v142
    %174 = vmatpush1.bf16.msra.mxu0 %v141
    %175 = vmatprep.subr.bf16.mxu0 %v144
    %176 = vmatpush1.bf16.msra.mxu0 %v143
    %177 = vmatprep.subr.bf16.mxu0 %v146
    %178 = vmatpush1.bf16.msra.mxu0 %v145
    %179 = vmatprep.subr.bf16.mxu0 %v148
    %180 = vmatpush1.bf16.msra.mxu0 %v147
    %181 = vmatprep.subr.bf16.mxu0 %v150
    %182 = vmatpush1.bf16.msra.mxu0 %v149
    %183 = vmatprep.subr.bf16.mxu0 %v152
    %184 = vmatpush1.bf16.msra.mxu0 %v151
    %185 = vmatprep.subr.bf16.mxu0 %v154
    %186 = vmatpush1.bf16.msra.mxu0 %v153
    %187 = vmatprep.subr.bf16.mxu0 0
    %188 = vmatpush1.bf16.msra.mxu0 0
    %189 = vmatprep.subr.bf16.mxu0 0
    %190 = vmatpush1.bf16.msra.mxu0 0
    %191 = vmatprep.subr.bf16.mxu0 0
    %192 = vmatpush1.bf16.msra.mxu0 0
    %193 = vmatprep.subr.bf16.mxu0 0
    %194 = vmatpush1.bf16.msra.mxu0 0
    %195 = vmatprep.subr.bf16.mxu0 0
    %196 = vmatpush1.bf16.msra.mxu0 0
    %197 = vmatprep.subr.bf16.mxu0 0
    %198 = vmatpush1.bf16.msra.mxu0 0
    %199 = vmatprep.subr.bf16.mxu0 0
    %200 = vmatpush1.bf16.msra.mxu0 0
    %201 = vmatprep.subr.bf16.mxu0 0
    %202 = vmatpush1.bf16.msra.mxu0 0
    %203 = vmatprep.mubr.bf16.mxu0 0
    %204 = vmatmul.mubr.bf16.gmra.mrb[0].mxu0 %v62
    %v205 = vpop.f32.mrb[0].mxu0
    %v206 = vadd.f32 %v84, %v205
    %v207 = vpop.f32.mrb[0].mxu0
    %v208 = vadd.f32 %v88, %v207
    %v209 = vpop.f32.mrb[0].mxu0
    %v210 = vpop.f32.mrb[0].mxu0
    %211 = vdwg.mxu0
    %v212 = vmax.f32 %v206, 0.0
    %v213 = vmax.f32 %v208, 0.0
    %v214 = vpack.c.bf16 %v212, %v212
    %v215 = vpack.c.bf16 %v213, %v213
    %v216 = vld [vmem:[#allocation7] sm:$0xf]
    %v217 = vld [vmem:[#allocation7 + $0x4] sm:$0xf]
    %v218 = vld [vmem:[#allocation7 + $0x8] sm:$0xf]
    %v219 = vld [vmem:[#allocation7 + $0xc] sm:$0xf]
    %v220 = vld [vmem:[#allocation7 + $0x10] sm:$0xf]
    %v221 = vld [vmem:[#allocation7 + $0x14] sm:$0xf]
    %v222 = vld [vmem:[#allocation7 + $0x18] sm:$0xf]
    %v223 = vld [vmem:[#allocation7 + $0x1c] sm:$0xf]
    %v224 = vld [vmem:[#allocation7 + $0x20] sm:$0xf]
    %v225 = vld [vmem:[#allocation7 + $0x24] sm:$0xf]
    %v226 = vld [vmem:[#allocation7 + $0x28] sm:$0xf]
    %v227 = vld [vmem:[#allocation7 + $0x2c] sm:$0xf]
    %v228 = vld [vmem:[#allocation7 + $0x30] sm:$0xf]
    %v229 = vld [vmem:[#allocation7 + $0x34] sm:$0xf]
    %v230 = vld [vmem:[#allocation7 + $0x38] sm:$0xf]
    %v231 = vld [vmem:[#allocation7 + $0x3c] sm:$0xf]
    %v232 = vld [vmem:[#allocation7 + $0x40] sm:$0xf]
    %v233 = vld [vmem:[#allocation7 + $0x44] sm:$0xf]
    %v234 = vld [vmem:[#allocation7 + $0x48] sm:$0xf]
    %v235 = vld [vmem:[#allocation7 + $0x4c] sm:$0xf]
    %v236 = vld [vmem:[#allocation7 + $0x50] sm:$0xf]
    %v237 = vld [vmem:[#allocation7 + $0x54] sm:$0xf]
    %v238 = vld [vmem:[#allocation7 + $0x58] sm:$0xf]
    %v239 = vld [vmem:[#allocation7 + $0x5c] sm:$0xf]
    %v240 = vld [vmem:[#allocation7 + $0x60] sm:$0xf]
    %v241 = vld [vmem:[#allocation7 + $0x64] sm:$0xf]
    %v242 = vld [vmem:[#allocation7 + $0x68] sm:$0xf]
    %v243 = vld [vmem:[#allocation7 + $0x6c] sm:$0xf]
    %v244 = vld [vmem:[#allocation7 + $0x70] sm:$0xf]
    %v245 = vld [vmem:[#allocation7 + $0x74] sm:$0xf]
    %v246 = vld [vmem:[#allocation7 + $0x78] sm:$0xf]
    %v247 = vld [vmem:[#allocation7 + $0x7c] sm:$0xf]
    %v248 = vld [vmem:[%s4] sm:$0x1]
    %v250 = vlaneseq
    %v251 = vshrl.u32 %v250, 7
    %v252 = vsub.s32 0, %v251
    %v253 = vrot.slane %v248, %v252
    %v287 = vunpack.c.l.b16 %v216
    %v288 = vunpack.c.l.b16 %v217
    %v289 = vunpack.c.l.b16 %v218
    %v290 = vunpack.c.l.b16 %v219
    %v291 = vunpack.c.l.b16 %v220
    %v292 = vunpack.c.l.b16 %v221
    %v293 = vunpack.c.l.b16 %v222
    %v294 = vunpack.c.l.b16 %v223
    %v295 = vunpack.c.l.b16 %v224
    %v296 = vunpack.c.l.b16 %v225
    %v297 = vunpack.c.l.b16 %v226
    %v298 = vunpack.c.l.b16 %v227
    %v299 = vunpack.c.l.b16 %v228
    %v300 = vunpack.c.l.b16 %v229
    %v301 = vunpack.c.l.b16 %v230
    %v302 = vunpack.c.l.b16 %v231
    %v303 = vunpack.c.l.b16 %v232
    %v304 = vunpack.c.l.b16 %v233
    %v305 = vunpack.c.l.b16 %v234
    %v306 = vunpack.c.l.b16 %v235
    %v307 = vunpack.c.l.b16 %v236
    %v308 = vunpack.c.l.b16 %v237
    %v309 = vunpack.c.l.b16 %v238
    %v310 = vunpack.c.l.b16 %v239
    %v311 = vunpack.c.l.b16 %v240
    %v312 = vunpack.c.l.b16 %v241
    %v313 = vunpack.c.l.b16 %v242
    %v314 = vunpack.c.l.b16 %v243
    %v315 = vunpack.c.l.b16 %v244
    %v316 = vunpack.c.l.b16 %v245
    %v317 = vunpack.c.l.b16 %v246
    %v318 = vunpack.c.l.b16 %v247
    %v319 = vpack.c.b16 %v288, %v287
    %v320 = vpack.c.b16 %v290, %v289
    %v321 = vpack.c.b16 %v292, %v291
    %v322 = vpack.c.b16 %v294, %v293
    %v323 = vpack.c.b16 %v296, %v295
    %v324 = vpack.c.b16 %v298, %v297
    %v325 = vpack.c.b16 %v300, %v299
    %v326 = vpack.c.b16 %v302, %v301
    %v327 = vpack.c.b16 %v304, %v303
    %v328 = vpack.c.b16 %v306, %v305
    %v329 = vpack.c.b16 %v308, %v307
    %v330 = vpack.c.b16 %v310, %v309
    %v331 = vpack.c.b16 %v312, %v311
    %v332 = vpack.c.b16 %v314, %v313
    %v333 = vpack.c.b16 %v316, %v315
    %v334 = vpack.c.b16 %v318, %v317
    %351 = vmatprep.subr.bf16.mxu0 0
    %352 = vmatpush1.bf16.msra.mxu0 %v319
    %353 = vmatprep.subr.bf16.mxu0 0
    %354 = vmatpush1.bf16.msra.mxu0 %v320
    %355 = vmatprep.subr.bf16.mxu0 0
    %356 = vmatpush1.bf16.msra.mxu0 %v321
    %357 = vmatprep.subr.bf16.mxu0 0
    %358 = vmatpush1.bf16.msra.mxu0 %v322
    %359 = vmatprep.subr.bf16.mxu0 0
    %360 = vmatpush1.bf16.msra.mxu0 %v323
    %361 = vmatprep.subr.bf16.mxu0 0
    %362 = vmatpush1.bf16.msra.mxu0 %v324
    %363 = vmatprep.subr.bf16.mxu0 0
    %364 = vmatpush1.bf16.msra.mxu0 %v325
    %365 = vmatprep.subr.bf16.mxu0 0
    %366 = vmatpush1.bf16.msra.mxu0 %v326
    %367 = vmatprep.subr.bf16.mxu0 0
    %368 = vmatpush1.bf16.msra.mxu0 %v327
    %369 = vmatprep.subr.bf16.mxu0 0
    %370 = vmatpush1.bf16.msra.mxu0 %v328
    %371 = vmatprep.subr.bf16.mxu0 0
    %372 = vmatpush1.bf16.msra.mxu0 %v329
    %373 = vmatprep.subr.bf16.mxu0 0
    %374 = vmatpush1.bf16.msra.mxu0 %v330
    %375 = vmatprep.subr.bf16.mxu0 0
    %376 = vmatpush1.bf16.msra.mxu0 %v331
    %377 = vmatprep.subr.bf16.mxu0 0
    %378 = vmatpush1.bf16.msra.mxu0 %v332
    %379 = vmatprep.subr.bf16.mxu0 0
    %380 = vmatpush1.bf16.msra.mxu0 %v333
    %381 = vmatprep.subr.bf16.mxu0 0
    %382 = vmatpush1.bf16.msra.mxu0 %v334
    %383 = vmatprep.mubr.bf16.mxu0 %v215
    %384 = vmatmul.mubr.bf16.gmra.mrb[0].mxu0 %v214
    %v385 = vpop.f32.mrb[0].mxu0
    %v386 = vadd.f32 %v253, %v385
    %v387 = vpop.f32.mrb[0].mxu0
    %v388 = vpop.f32.mrb[0].mxu0
    %v389 = vpop.f32.mrb[0].mxu0
    %390 = vdwg.mxu0
    %v391 = vmax.f32 %v386, 0.0
    %392 = vst [vmem:[#allocation8] sm:$0xff] %v391
    // Predicated region
    $region34: #{tpu_custom_call.1} parent=1 // pred_check
      _
    $region35: #{tpu_custom_call.1} parent=1 // pred_check_branch
      %394 = sbr.rel (0) target = $region37
    $region36: #{tpu_custom_call.1} parent=1 // pred_region
      %s396 = ssub.s32 128, 128
      %397 = vsyncadd [#allocation4], %s396
      %s399 = sshll.u32 [#allocation8], 4
      %s400 = int_to_ptr.vmem [resolvable:$true] %s399
      %402 = dma.vmem_to_hbm [thread:$0]  %s400, 128, %s5, [#allocation4]
    $region37: #{tpu_custom_call.1} parent=1 // pred_fallthru
      _
    // Predicated region
    $region38: #{tpu_custom_call.1} parent=1 // pred_check
      _
    $region39: #{tpu_custom_call.1} parent=1 // pred_check_branch
      %404 = sbr.rel (0) target = $region41
    $region40: #{tpu_custom_call.1} parent=1 // pred_region
      %405 = dma.done [#allocation4], 128
    $region41: #{tpu_custom_call.1} parent=1 // pred_fallthru
      _
    %406 = vsyncpa [#allocation3], 1
    %407 = vsyncpa [#allocation6], 1
    %408 = vsyncpa [#allocation4], 1

</llo_original>
